<compile_context>
chip_gen: v7x
topology: tpu7x:2x2x1
jax: 0.10.0
libtpu: 0.0.40
codegen_flags: <defaults>
</compile_context>

<pallas_src>
import jax
import jax.numpy as jnp
from jax import lax
from jax.experimental import pallas as pl
from jax.experimental.pallas import tpu as pltpu


def _round_up(x: int, m: int) -> int:
    return ((x + m - 1) // m) * m


def _vmem_budget_bytes() -> int:
    """~75% of physical VMEM (leaves headroom for compiler-internal scratch)."""
    cap = 64 * 1024 * 1024  # conservative fallback (v7x-sized)
    try:
        info = pltpu.get_tpu_info()
        cap = int(getattr(info, "vmem_capacity_bytes", cap))
    except Exception:
        pass
    return (cap * 3) // 4


def _pick_th(H: int, th_cap: int) -> int:
    """Largest H tile <= th_cap that divides H; multiples of 256 preferred."""
    if H <= th_cap:
        return H
    cand = (th_cap // 256) * 256
    while cand >= 256:
        if H % cand == 0:
            return cand
        cand -= 256
    return H


# Contract dim 1 of the activations with dim 1 of the weights, i.e. x @ W^T
# without materializing any transpose (weights keep PyTorch Linear layout).
_CN = (((1,), (1,)), ((), ()))


def _silu_mul(g, u):
    return (g * jax.nn.sigmoid(g)) * u


def _swiglu_resident_kernel(x_ref, w1_ref, w3_ref, w2_ref, o_ref):
    # Grid = (M_tiles,). Whole W1/W3/W2 resident in VMEM; no accumulator.
    x = x_ref[...]
    g = lax.dot_general(x, w1_ref[...], _CN, preferred_element_type=jnp.float32)
    u = lax.dot_general(x, w3_ref[...], _CN, preferred_element_type=jnp.float32)
    h = _silu_mul(g, u).astype(w2_ref.dtype)
    o_ref[...] = lax.dot_general(
        h, w2_ref[...], _CN, preferred_element_type=jnp.float32
    ).astype(o_ref.dtype)


def _swiglu_stream_f32out_kernel(x_ref, w1_ref, w3_ref, w2_ref, o_ref):
    # Grid = (M_tiles, H_tiles); H is the reduction axis. Output is f32 and
    # resident across the H axis -> accumulate directly into o_ref (no scratch).
    k = pl.program_id(1)
    x = x_ref[...]
    g = lax.dot_general(x, w1_ref[...], _CN, preferred_element_type=jnp.float32)
    u = lax.dot_general(x, w3_ref[...], _CN, preferred_element_type=jnp.float32)
    h = _silu_mul(g, u).astype(w2_ref.dtype)
    partial = lax.dot_general(h, w2_ref[...], _CN,
                              preferred_element_type=jnp.float32)

    @pl.when(k == 0)
    def _():
        o_ref[...] = partial          # first H slice: store (no zero-init)

    @pl.when(k > 0)
    def _():
        o_ref[...] += partial


def _swiglu_stream_acc_kernel(x_ref, w1_ref, w3_ref, w2_ref, o_ref, acc_ref):
    # Grid = (M_tiles, H_tiles); non-f32 output -> f32 VMEM accumulator.
    k = pl.program_id(1)
    x = x_ref[...]
    g = lax.dot_general(x, w1_ref[...], _CN, preferred_element_type=jnp.float32)
    u = lax.dot_general(x, w3_ref[...], _CN, preferred_element_type=jnp.float32)
    h = _silu_mul(g, u).astype(w2_ref.dtype)
    partial = lax.dot_general(h, w2_ref[...], _CN,
                              preferred_element_type=jnp.float32)

    @pl.when(k == 0)
    def _():
        acc_ref[...] = partial        # first H slice: store (no zero-init)

    @pl.when(k > 0)
    def _():
        acc_ref[...] += partial

    @pl.when(k == pl.num_programs(1) - 1)
    def _():
        o_ref[...] = acc_ref[...].astype(o_ref.dtype)


def swiglu_pallas(x, w1, w2, w3, *, tm=512, th=512, allow_resident=True,
                  cast_weights_to=None, vmem_limit_bytes=None):
    """SwiGLU forward.

    x:  [..., D]
    w1: [H, D]  (PyTorch Linear weight layout, gate proj)
    w2: [D, H]  (down proj)
    w3: [H, D]  (up proj)
    cast_weights_to: optionally cast weights (e.g. jnp.bfloat16) before the
        matmuls; accumulation stays f32. Off by default (exact f32 semantics).
    """
    *lead, D = x.shape
    H, D1 = w1.shape
    assert D1 == D and w3.shape == (H, D) and w2.shape == (D, H)

    if cast_weights_to is not None:
        w1 = w1.astype(cast_weights_to)
        w2 = w2.astype(cast_weights_to)
        w3 = w3.astype(cast_weights_to)

    x2 = x.reshape(-1, D)
    M = x2.shape[0]
    out_dtype = x.dtype

    x_it = jnp.dtype(x.dtype).itemsize
    w_it = jnp.dtype(w1.dtype).itemsize
    o_it = jnp.dtype(out_dtype).itemsize
    out_is_f32 = jnp.dtype(out_dtype) == jnp.dtype(jnp.float32)

    # dtype-aware sublane alignment for the token (M) dim: 8 f32 / 16 bf16 / 32 i8.
    m_align = max(8, 32 // x_it)

    budget = int(_vmem_budget_bytes() if vmem_limit_bytes is None
                 else vmem_limit_bytes)

    # Token tile: clamp to the (aligned) token count.
    tm_eff = min(_round_up(tm, m_align), _round_up(M, m_align))

    # ---- path selection: weights-resident fast path vs. H-streaming ----
    w_resident_bytes = 2 * 3 * D * H * w_it      # conservative (double-buffered)
    use_resident = allow_resident and (w_resident_bytes <= budget // 2)

    if use_resident:
        def resident_bytes(tm_e):
            return w_resident_bytes + 2 * tm_e * D * (x_it + o_it)

        while resident_bytes(tm_eff) > budget and tm_eff > m_align:
            tm_eff = max(m_align, tm_eff // 2)
        th_eff = H
    else:
        th_eff = _pick_th(H, th)

        def stream_bytes(tm_e, th_e):
            b = 2 * tm_e * D * (x_it + o_it)     # x + out tiles (double-buffered)
            b += 2 * 3 * th_e * D * w_it         # W1/W3/W2 tiles (double-buffered)
            if not out_is_f32:
                b += tm_e * D * 4                # f32 accumulator scratch
            return b

        while stream_bytes(tm_eff, th_eff) > budget and tm_eff > m_align:
            tm_eff = max(m_align, tm_eff // 2)
        th_cap = th_eff
        while stream_bytes(tm_eff, th_eff) > budget and th_cap > 256:
            th_cap //= 2
            th_eff = _pick_th(H, th_cap)

    # Pad M up to a multiple of the token tile (padded rows are sliced off).
    M_pad = _round_up(max(M, 1), tm_eff)
    if M_pad != M:
        x2 = jnp.pad(x2, ((0, M_pad - M), (0, 0)))
    num_m = M_pad // tm_eff

    # Cost hint with actual traffic: weights are re-read once per M tile in the
    # streaming path, once total in the resident path.
    w_bytes_total = int((w1.size + w2.size + w3.size) * w_it)
    weight_reads = 1 if use_resident else num_m
    cost = pl.CostEstimate(
        flops=6 * M_pad * D * H,
        transcendentals=M_pad * H,
        bytes_accessed=int(M_pad * D * (x_it + o_it) + weight_reads * w_bytes_total),
    )

    if use_resident:
        out = pl.pallas_call(
            _swiglu_resident_kernel,
            out_shape=jax.ShapeDtypeStruct((M_pad, D), out_dtype),
            grid_spec=pltpu.PrefetchScalarGridSpec(
                num_scalar_prefetch=0,
                grid=(num_m,),
                in_specs=[
                    pl.BlockSpec((tm_eff, D), lambda i: (i, 0)),   # x tile
                    pl.BlockSpec((H, D), lambda i: (0, 0)),        # W1 (resident)
                    pl.BlockSpec((H, D), lambda i: (0, 0)),        # W3 (resident)
                    pl.BlockSpec((D, H), lambda i: (0, 0)),        # W2 (resident)
                ],
                out_specs=pl.BlockSpec((tm_eff, D), lambda i: (i, 0)),
            ),
            compiler_params=pltpu.CompilerParams(
                dimension_semantics=("parallel",),
                vmem_limit_bytes=budget,
            ),
            cost_estimate=cost,
        )(x2, w1, w3, w2)
    else:
        kernel = (_swiglu_stream_f32out_kernel if out_is_f32
                  else _swiglu_stream_acc_kernel)
        scratch = [] if out_is_f32 else [pltpu.VMEM((tm_eff, D), jnp.float32)]
        out = pl.pallas_call(
            kernel,
            out_shape=jax.ShapeDtypeStruct((M_pad, D), out_dtype),
            grid_spec=pltpu.PrefetchScalarGridSpec(
                num_scalar_prefetch=0,
                grid=(num_m, H // th_eff),
                in_specs=[
                    pl.BlockSpec((tm_eff, D), lambda i, k: (i, 0)),  # x tile
                    pl.BlockSpec((th_eff, D), lambda i, k: (k, 0)),  # W1 tile
                    pl.BlockSpec((th_eff, D), lambda i, k: (k, 0)),  # W3 tile
                    pl.BlockSpec((D, th_eff), lambda i, k: (0, k)),  # W2 tile
                ],
                out_specs=pl.BlockSpec((tm_eff, D), lambda i, k: (i, 0)),
                scratch_shapes=scratch,
            ),
            compiler_params=pltpu.CompilerParams(
                dimension_semantics=("parallel", "arbitrary"),
                vmem_limit_bytes=budget,
            ),
            cost_estimate=cost,
        )(x2, w1, w3, w2)

    if M_pad != M:
        out = out[:M]
    return out.reshape(*lead, D)


def _swiglu_ref(x, w1, w2, w3):
    g = x @ w1.T
    gate = g * jax.nn.sigmoid(g)
    return (gate * (x @ w3.T)) @ w2.T


if __name__ == "__main__":
    key = jax.random.PRNGKey(0)
    k_x, k_w1, k_w2, k_w3 = jax.random.split(key, 4)

    B, S = 2, 8          # batch, sequence
    D, H = 128, 512      # input_dim, hidden_dim

    x = jax.random.normal(k_x, (B, S, D), dtype=jnp.float32)
    # deterministic synthetic params (match torch.randn init shapes)
    w1 = jax.random.normal(k_w1, (H, D), dtype=jnp.float32)  # w1.weight
    w2 = jax.random.normal(k_w2, (D, H), dtype=jnp.float32)  # w2.weight
    w3 = jax.random.normal(k_w3, (H, D), dtype=jnp.float32)  # w3.weight

    y_ref = _swiglu_ref(x, w1, w2, w3)

    # 1) weights-resident fast path (small D*H fits comfortably in VMEM).
    y_res = swiglu_pallas(x, w1, w2, w3)
    jax.block_until_ready(y_res)
    assert y_res.shape == (B, S, D) and y_res.dtype == x.dtype
    assert jnp.allclose(y_res, y_ref, rtol=5e-3, atol=1e-1), "resident mismatch"

    # 2) streaming path: H split into 2 tiles, f32 output accumulated in-place.
    y_str = swiglu_pallas(x, w1, w2, w3, th=256, allow_resident=False)
    jax.block_until_ready(y_str)
    assert y_str.shape == (B, S, D) and y_str.dtype == x.dtype
    assert jnp.allclose(y_str, y_ref, rtol=5e-3, atol=1e-1), "streaming mismatch"

    # 3) bf16 inputs/weights, streaming path with the f32 accumulator scratch.
    y_bf = swiglu_pallas(x.astype(jnp.bfloat16),
                         w1.astype(jnp.bfloat16),
                         w2.astype(jnp.bfloat16),
                         w3.astype(jnp.bfloat16),
                         th=256, allow_resident=False)
    jax.block_until_ready(y_bf)
    assert y_bf.shape == (B, S, D) and y_bf.dtype == jnp.bfloat16
    assert bool(jnp.all(jnp.isfinite(y_bf.astype(jnp.float32))))

    print("KERNEL_OK")
</pallas_src>

<mosaic_0001>
module attributes {stable_mosaic.version = 11 : i64} {
  func.func @_swiglu_resident_kernel(%arg0: i32, %arg1: memref<16x128xf32, #tpu.memory_space<vmem>>, %arg2: memref<512x128xf32, #tpu.memory_space<vmem>>, %arg3: memref<512x128xf32, #tpu.memory_space<vmem>>, %arg4: memref<128x512xf32, #tpu.memory_space<vmem>>, %arg5: memref<16x128xf32, #tpu.memory_space<vmem>>) attributes {dimension_semantics = [#tpu.dimension_semantics<parallel>], iteration_bounds = array<i64: 1>, scalar_prefetch = 0 : i64, scratch_operands = 0 : i64, tpu.core_type = #tpu.core_type<tc>, window_params = [{transform_indices = @transform_0, window_bounds = array<i64: 16, 128>}, {pipeline_mode = #tpu.pipeline_mode<synchronous>, transform_indices = @transform_1, window_bounds = array<i64: 512, 128>}, {pipeline_mode = #tpu.pipeline_mode<synchronous>, transform_indices = @transform_2, window_bounds = array<i64: 512, 128>}, {pipeline_mode = #tpu.pipeline_mode<synchronous>, transform_indices = @transform_3, window_bounds = array<i64: 128, 512>}, {transform_indices = @transform_4, window_bounds = array<i64: 16, 128>}]} {
    %c0 = arith.constant 0 : index
    %c0_0 = arith.constant 0 : index
    %0 = vector.load %arg1[%c0, %c0_0] : memref<16x128xf32, #tpu.memory_space<vmem>>, vector<16x128xf32>
    %c0_1 = arith.constant 0 : index
    %c0_2 = arith.constant 0 : index
    %1 = vector.load %arg2[%c0_1, %c0_2] : memref<512x128xf32, #tpu.memory_space<vmem>>, vector<512x128xf32>
    %cst = arith.constant dense<0.000000e+00> : vector<16x512xf32>
    %2 = tpu.matmul %0, %1, %cst {dimension_numbers = #tpu.dot_dimension_numbers<[1], [1], [0], [0], [0, 0, 1, 0], [], []>} : vector<16x128xf32>, vector<512x128xf32>, vector<16x512xf32> -> vector<16x512xf32>
    %c0_3 = arith.constant 0 : index
    %c0_4 = arith.constant 0 : index
    %3 = vector.load %arg3[%c0_3, %c0_4] : memref<512x128xf32, #tpu.memory_space<vmem>>, vector<512x128xf32>
    %cst_5 = arith.constant dense<0.000000e+00> : vector<16x512xf32>
    %4 = tpu.matmul %0, %3, %cst_5 {dimension_numbers = #tpu.dot_dimension_numbers<[1], [1], [0], [0], [0, 0, 1, 0], [], []>} : vector<16x128xf32>, vector<512x128xf32>, vector<16x512xf32> -> vector<16x512xf32>
    %5 = arith.negf %2 : vector<16x512xf32>
    %6 = math.exp %5 : vector<16x512xf32>
    %cst_6 = arith.constant 1.000000e+00 : f32
    %7 = vector.broadcast %cst_6 : f32 to vector<16x512xf32>
    %8 = arith.addf %7, %6 : vector<16x512xf32>
    %9 = arith.divf %7, %8 : vector<16x512xf32>
    %10 = arith.mulf %2, %9 : vector<16x512xf32>
    %11 = arith.mulf %10, %4 : vector<16x512xf32>
    %c0_7 = arith.constant 0 : index
    %c0_8 = arith.constant 0 : index
    %12 = vector.load %arg4[%c0_7, %c0_8] : memref<128x512xf32, #tpu.memory_space<vmem>>, vector<128x512xf32>
    %cst_9 = arith.constant dense<0.000000e+00> : vector<16x128xf32>
    %13 = tpu.matmul %11, %12, %cst_9 {dimension_numbers = #tpu.dot_dimension_numbers<[1], [1], [0], [0], [0, 0, 1, 0], [], []>} : vector<16x512xf32>, vector<128x512xf32>, vector<16x128xf32> -> vector<16x128xf32>
    %c0_10 = arith.constant 0 : index
    %c0_11 = arith.constant 0 : index
    %14 = vector.load %arg5[%c0_10, %c0_11] : memref<16x128xf32, #tpu.memory_space<vmem>>, vector<16x128xf32>
    tpu.vector_store %arg5[%c0_10, %c0_11], %13 {strides = array<i32>} : memref<16x128xf32, #tpu.memory_space<vmem>>, vector<16x128xf32>,
    return
  }
  func.func @transform_0(%arg0: i32) -> (i32, i32) {
    %c0_i32 = arith.constant 0 : i32
    %c0_i32_0 = arith.constant 0 : i32
    return %arg0, %c0_i32 : i32, i32
  }
  func.func @transform_1(%arg0: i32) -> (i32, i32) {
    %c0_i32 = arith.constant 0 : i32
    %c0_i32_0 = arith.constant 0 : i32
    %c0_i32_1 = arith.constant 0 : i32
    return %c0_i32, %c0_i32_0 : i32, i32
  }
  func.func @transform_2(%arg0: i32) -> (i32, i32) {
    %c0_i32 = arith.constant 0 : i32
    %c0_i32_0 = arith.constant 0 : i32
    %c0_i32_1 = arith.constant 0 : i32
    return %c0_i32, %c0_i32_0 : i32, i32
  }
  func.func @transform_3(%arg0: i32) -> (i32, i32) {
    %c0_i32 = arith.constant 0 : i32
    %c0_i32_0 = arith.constant 0 : i32
    %c0_i32_1 = arith.constant 0 : i32
    return %c0_i32, %c0_i32_0 : i32, i32
  }
  func.func @transform_4(%arg0: i32) -> (i32, i32) {
    %c0_i32 = arith.constant 0 : i32
    %c0_i32_0 = arith.constant 0 : i32
    return %arg0, %c0_i32 : i32, i32
  }
}

</mosaic_0001>

<llo_original>
// kernel: tpu_custom_call.1
$region0: #{tpu_custom_call.1}
  #allocation0 [shape = 'u32[]', space=smem, size = 0x4, offset = 0x4, fixed_abs, tag = 'smem constant byte address 0x4 - core index']
  #allocation1 [shape = 'u32[144,128]{1,0:T(1,128)}', space=vmem, size = 0x12000, scoped, tag = 'internal scratch']
  %s0 = inlined_call_operand.hbm [shape: f32[16,128], index: 0, kind: input, shape index: {}]
  %s1 = inlined_call_operand.hbm [shape: f32[512,128], index: 1, kind: input, shape index: {}]
  %s2 = inlined_call_operand.hbm [shape: f32[512,128], index: 2, kind: input, shape index: {}]
  %s3 = inlined_call_operand.hbm [shape: f32[128,512], index: 3, kind: input, shape index: {}]
  %s4 = inlined_call_operand.hbm [shape: f32[16,128], index: 4, kind: output, shape index: {}]
  %s5 = sld [smem:[#allocation0]]
  $region42: #{tpu_custom_call.1} parent=0
    _
  %s7 = ssub.s32 1, %s5
  %s8 = scalar_select 0, %s7, %s5
  $region1: #{tpu_custom_call.1} parent=0
    #allocation2 [shape = 'u8[8192]{0}', space=vmem, size = 0x2000, scoped, tag = 'input window, operand 0, single buffered']
    #allocation3 [shape = 's32[1]{0}', space=sflag, size = 0x4, scoped, tag = 'scoped memory for tpu_custom_call.1']
    #allocation4 [shape = 's32[1]{0}', space=sflag, size = 0x4, scoped, tag = 'scoped memory for tpu_custom_call.1']
    #allocation5 [shape = 'u8[262144]{0}', space=vmem, size = 0x40000, scoped, tag = 'input window, operand 1, single buffered']
    #allocation6 [shape = 's32[1]{0}', space=sflag, size = 0x4, scoped, tag = 'scoped memory for tpu_custom_call.1']
    #allocation7 [shape = 'u8[262144]{0}', space=vmem, size = 0x40000, scoped, tag = 'input window, operand 2, single buffered']
    #allocation8 [shape = 'u8[262144]{0}', space=vmem, size = 0x40000, scoped, tag = 'input window, operand 3, single buffered']
    #allocation9 [shape = 's32[1]{0}', space=sflag, size = 0x4, scoped, tag = 'scoped memory for tpu_custom_call.1']
    #allocation10 [shape = 'u8[8192]{0}', space=vmem, size = 0x2000, scoped, tag = 'output window, operand 0, single buffered']
    %9 = vsyncpa [#allocation3], 0
    %10 = vsyncpa [#allocation6], 0
    %11 = vsyncpa [#allocation9], 0
    %12 = vsyncpa [#allocation4], 0
    // Predicated region
    $region2: #{tpu_custom_call.1} parent=1 // pred_check
      _
    $region3: #{tpu_custom_call.1} parent=1 // pred_check_branch
      %14 = sbr.rel (0) target = $region5
    $region4: #{tpu_custom_call.1} parent=1 // pred_region
      %s16 = ssub.s32 256, 256
      %17 = vsyncadd [#allocation3], %s16
      %s18 = sshll.u32 [#allocation2], 4
      %s19 = int_to_ptr.vmem [resolvable:$true] %s18
      %24 = dma.hbm_to_vmem [thread:$0]  %s0, 256, %s19, [#allocation3], 128, 128, 8
    $region5: #{tpu_custom_call.1} parent=1 // pred_fallthru
      _
    // Predicated region
    $region6: #{tpu_custom_call.1} parent=1 // pred_check
      _
    $region7: #{tpu_custom_call.1} parent=1 // pred_check_branch
      %26 = sbr.rel (0) target = $region9
    $region8: #{tpu_custom_call.1} parent=1 // pred_region
      %s28 = ssub.s32 8192, 8192
      %29 = vsyncadd [#allocation6], %s28
      %s30 = sshll.u32 [#allocation5], 4
      %s31 = int_to_ptr.vmem [resolvable:$true] %s30
      %36 = dma.hbm_to_vmem [thread:$0]  %s1, 8192, %s31, [#allocation6], 128, 128, 8
    $region9: #{tpu_custom_call.1} parent=1 // pred_fallthru
      _
    // Predicated region
    $region10: #{tpu_custom_call.1} parent=1 // pred_check
      _
    $region11: #{tpu_custom_call.1} parent=1 // pred_check_branch
      %38 = sbr.rel (0) target = $region13
    $region12: #{tpu_custom_call.1} parent=1 // pred_region
      %s40 = ssub.s32 8192, 8192
      %41 = vsyncadd [#allocation6], %s40
      %s42 = sshll.u32 [#allocation7], 4
      %s43 = int_to_ptr.vmem [resolvable:$true] %s42
      %48 = dma.hbm_to_vmem [thread:$0]  %s2, 8192, %s43, [#allocation6], 128, 128, 8
    $region13: #{tpu_custom_call.1} parent=1 // pred_fallthru
      _
    // Predicated region
    $region14: #{tpu_custom_call.1} parent=1 // pred_check
      _
    $region15: #{tpu_custom_call.1} parent=1 // pred_check_branch
      %50 = sbr.rel (0) target = $region17
    $region16: #{tpu_custom_call.1} parent=1 // pred_region
      %s52 = ssub.s32 8192, 8192
      %53 = vsyncadd [#allocation9], %s52
      %s54 = sshll.u32 [#allocation8], 4
      %s55 = int_to_ptr.vmem [resolvable:$true] %s54
      %60 = dma.hbm_to_vmem [thread:$0]  %s3, 8192, %s55, [#allocation9], 512, 512, 32
    $region17: #{tpu_custom_call.1} parent=1 // pred_fallthru
      _
    // Predicated region
    $region18: #{tpu_custom_call.1} parent=1 // pred_check
      _
    $region19: #{tpu_custom_call.1} parent=1 // pred_check_branch
      %62 = sbr.rel (0) target = $region21
    $region20: #{tpu_custom_call.1} parent=1 // pred_region
      %63 = dma.done [#allocation3], 256
    $region21: #{tpu_custom_call.1} parent=1 // pred_fallthru
      _
    // Predicated region
    $region22: #{tpu_custom_call.1} parent=1 // pred_check
      _
    $region23: #{tpu_custom_call.1} parent=1 // pred_check_branch
      %65 = sbr.rel (0) target = $region25
    $region24: #{tpu_custom_call.1} parent=1 // pred_region
      %66 = dma.done [#allocation6], 8192
    $region25: #{tpu_custom_call.1} parent=1 // pred_fallthru
      _
    // Predicated region
    $region26: #{tpu_custom_call.1} parent=1 // pred_check
      _
    $region27: #{tpu_custom_call.1} parent=1 // pred_check_branch
      %68 = sbr.rel (0) target = $region29
    $region28: #{tpu_custom_call.1} parent=1 // pred_region
      %69 = dma.done [#allocation6], 8192
    $region29: #{tpu_custom_call.1} parent=1 // pred_fallthru
      _
    // Predicated region
    $region30: #{tpu_custom_call.1} parent=1 // pred_check
      _
    $region31: #{tpu_custom_call.1} parent=1 // pred_check_branch
      %71 = sbr.rel (0) target = $region33
    $region32: #{tpu_custom_call.1} parent=1 // pred_region
      %72 = dma.done [#allocation9], 8192
    $region33: #{tpu_custom_call.1} parent=1 // pred_fallthru
      _
    %v73 = vld [vmem:[#allocation2] sm:$0xff]
    %v74 = vld [vmem:[#allocation2 + $0x8] sm:$0xff]
    %v75 = vld [vmem:[#allocation5] sm:$0xff]
    %v76 = vld [vmem:[#allocation5 + $0x8] sm:$0xff]
    %v77 = vld [vmem:[#allocation5 + $0x10] sm:$0xff]
    %v78 = vld [vmem:[#allocation5 + $0x18] sm:$0xff]
    %v79 = vld [vmem:[#allocation5 + $0x20] sm:$0xff]
    %v80 = vld [vmem:[#allocation5 + $0x28] sm:$0xff]
    %v81 = vld [vmem:[#allocation5 + $0x30] sm:$0xff]
    %v82 = vld [vmem:[#allocation5 + $0x38] sm:$0xff]
    %v83 = vld [vmem:[#allocation5 + $0x40] sm:$0xff]
    %v84 = vld [vmem:[#allocation5 + $0x48] sm:$0xff]
    %v85 = vld [vmem:[#allocation5 + $0x50] sm:$0xff]
    %v86 = vld [vmem:[#allocation5 + $0x58] sm:$0xff]
    %v87 = vld [vmem:[#allocation5 + $0x60] sm:$0xff]
    %v88 = vld [vmem:[#allocation5 + $0x68] sm:$0xff]
    %v89 = vld [vmem:[#allocation5 + $0x70] sm:$0xff]
    %v90 = vld [vmem:[#allocation5 + $0x78] sm:$0xff]
    %v91 = vld [vmem:[#allocation5 + $0x80] sm:$0xff]
    %v92 = vld [vmem:[#allocation5 + $0x88] sm:$0xff]
    %v93 = vld [vmem:[#allocation5 + $0x90] sm:$0xff]
    %v94 = vld [vmem:[#allocation5 + $0x98] sm:$0xff]
    %v95 = vld [vmem:[#allocation5 + $0xa0] sm:$0xff]
    %v96 = vld [vmem:[#allocation5 + $0xa8] sm:$0xff]
    %v97 = vld [vmem:[#allocation5 + $0xb0] sm:$0xff]
    %v98 = vld [vmem:[#allocation5 + $0xb8] sm:$0xff]
    %v99 = vld [vmem:[#allocation5 + $0xc0] sm:$0xff]
    %v100 = vld [vmem:[#allocation5 + $0xc8] sm:$0xff]
    %v101 = vld [vmem:[#allocation5 + $0xd0] sm:$0xff]
    %v102 = vld [vmem:[#allocation5 + $0xd8] sm:$0xff]
    %v103 = vld [vmem:[#allocation5 + $0xe0] sm:$0xff]
    %v104 = vld [vmem:[#allocation5 + $0xe8] sm:$0xff]
    %v105 = vld [vmem:[#allocation5 + $0xf0] sm:$0xff]
    %v106 = vld [vmem:[#allocation5 + $0xf8] sm:$0xff]
    %v107 = vld [vmem:[#allocation5 + $0x100] sm:$0xff]
    %v108 = vld [vmem:[#allocation5 + $0x108] sm:$0xff]
    %v109 = vld [vmem:[#allocation5 + $0x110] sm:$0xff]
    %v110 = vld [vmem:[#allocation5 + $0x118] sm:$0xff]
    %v111 = vld [vmem:[#allocation5 + $0x120] sm:$0xff]
    %v112 = vld [vmem:[#allocation5 + $0x128] sm:$0xff]
    %v113 = vld [vmem:[#allocation5 + $0x130] sm:$0xff]
    %v114 = vld [vmem:[#allocation5 + $0x138] sm:$0xff]
    %v115 = vld [vmem:[#allocation5 + $0x140] sm:$0xff]
    %v116 = vld [vmem:[#allocation5 + $0x148] sm:$0xff]
    %v117 = vld [vmem:[#allocation5 + $0x150] sm:$0xff]
    %v118 = vld [vmem:[#allocation5 + $0x158] sm:$0xff]
    %v119 = vld [vmem:[#allocation5 + $0x160] sm:$0xff]
    %v120 = vld [vmem:[#allocation5 + $0x168] sm:$0xff]
    %v121 = vld [vmem:[#allocation5 + $0x170] sm:$0xff]
    %v122 = vld [vmem:[#allocation5 + $0x178] sm:$0xff]
    %v123 = vld [vmem:[#allocation5 + $0x180] sm:$0xff]
    %v124 = vld [vmem:[#allocation5 + $0x188] sm:$0xff]
    %v125 = vld [vmem:[#allocation5 + $0x190] sm:$0xff]
    %v126 = vld [vmem:[#allocation5 + $0x198] sm:$0xff]
    %v127 = vld [vmem:[#allocation5 + $0x1a0] sm:$0xff]
    %v128 = vld [vmem:[#allocation5 + $0x1a8] sm:$0xff]
    %v129 = vld [vmem:[#allocation5 + $0x1b0] sm:$0xff]
    %v130 = vld [vmem:[#allocation5 + $0x1b8] sm:$0xff]
    %v131 = vld [vmem:[#allocation5 + $0x1c0] sm:$0xff]
    %v132 = vld [vmem:[#allocation5 + $0x1c8] sm:$0xff]
    %v133 = vld [vmem:[#allocation5 + $0x1d0] sm:$0xff]
    %v134 = vld [vmem:[#allocation5 + $0x1d8] sm:$0xff]
    %v135 = vld [vmem:[#allocation5 + $0x1e0] sm:$0xff]
    %v136 = vld [vmem:[#allocation5 + $0x1e8] sm:$0xff]
    %v137 = vld [vmem:[#allocation5 + $0x1f0] sm:$0xff]
    %v138 = vld [vmem:[#allocation5 + $0x1f8] sm:$0xff]
    %139 = vmatprep.subr.mxu0 0.0
    %140 = vmatpush1.xpose.msra.mxu0 %v75
    %141 = vmatprep.subr.mxu0 0.0
    %142 = vmatpush1.xpose.msra.mxu0 %v76
    %143 = vmatprep.subr.mxu0 0.0
    %144 = vmatpush1.xpose.msra.mxu0 %v77
    %145 = vmatprep.subr.mxu0 0.0
    %146 = vmatpush1.xpose.msra.mxu0 %v78
    %147 = vmatprep.subr.mxu0 0.0
    %148 = vmatpush1.xpose.msra.mxu0 %v79
    %149 = vmatprep.subr.mxu0 0.0
    %150 = vmatpush1.xpose.msra.mxu0 %v80
    %151 = vmatprep.subr.mxu0 0.0
    %152 = vmatpush1.xpose.msra.mxu0 %v81
    %153 = vmatprep.subr.mxu0 0.0
    %154 = vmatpush1.xpose.msra.mxu0 %v82
    %155 = vmatprep.subr.mxu0 0.0
    %156 = vmatpush1.xpose.msra.mxu0 %v83
    %157 = vmatprep.subr.mxu0 0.0
    %158 = vmatpush1.xpose.msra.mxu0 %v84
    %159 = vmatprep.subr.mxu0 0.0
    %160 = vmatpush1.xpose.msra.mxu0 %v85
    %161 = vmatprep.subr.mxu0 0.0
    %162 = vmatpush1.xpose.msra.mxu0 %v86
    %163 = vmatprep.subr.mxu0 0.0
    %164 = vmatpush1.xpose.msra.mxu0 %v87
    %165 = vmatprep.subr.mxu0 0.0
    %166 = vmatpush1.xpose.msra.mxu0 %v88
    %167 = vmatprep.subr.mxu0 0.0
    %168 = vmatpush1.xpose.msra.mxu0 %v89
    %169 = vmatprep.subr.mxu0 0.0
    %170 = vmatpush1.xpose.msra.mxu0 %v90
    %171 = vmatprep.subr.mxu0 0.0
    %172 = vmatpush1.xpose.msra.mxu0 %v91
    %173 = vmatprep.subr.mxu0 0.0
    %174 = vmatpush1.xpose.msra.mxu0 %v92
    %175 = vmatprep.subr.mxu0 0.0
    %176 = vmatpush1.xpose.msra.mxu0 %v93
    %177 = vmatprep.subr.mxu0 0.0
    %178 = vmatpush1.xpose.msra.mxu0 %v94
    %179 = vmatprep.subr.mxu0 0.0
    %180 = vmatpush1.xpose.msra.mxu0 %v95
    %181 = vmatprep.subr.mxu0 0.0
    %182 = vmatpush1.xpose.msra.mxu0 %v96
    %183 = vmatprep.subr.mxu0 0.0
    %184 = vmatpush1.xpose.msra.mxu0 %v97
    %185 = vmatprep.subr.mxu0 0.0
    %186 = vmatpush1.xpose.msra.mxu0 %v98
    %187 = vmatprep.subr.mxu0 0.0
    %188 = vmatpush1.xpose.msra.mxu0 %v99
    %189 = vmatprep.subr.mxu0 0.0
    %190 = vmatpush1.xpose.msra.mxu0 %v100
    %191 = vmatprep.subr.mxu0 0.0
    %192 = vmatpush1.xpose.msra.mxu0 %v101
    %193 = vmatprep.subr.mxu0 0.0
    %194 = vmatpush1.xpose.msra.mxu0 %v102
    %195 = vmatprep.subr.mxu0 0.0
    %196 = vmatpush1.xpose.msra.mxu0 %v103
    %197 = vmatprep.subr.mxu0 0.0
    %198 = vmatpush1.xpose.msra.mxu0 %v104
    %199 = vmatprep.subr.mxu0 0.0
    %200 = vmatpush1.xpose.msra.mxu0 %v105
    %201 = vmatprep.subr.mxu0 0.0
    %202 = vmatpush1.xpose.msra.mxu0 %v106
    %203 = vmatprep.mubr.f32.mxu0 0.0
    %204 = vmatmul.mubr.f32.gmra.mrb[0].mxu0 %v73
    %v205 = vpop.f32.mrb[0].mxu0
    %v206 = vadd.f32 0.0, %v205
    %v207 = vpop.f32.mrb[0].mxu0
    %v208 = vadd.f32 0.0, %v207
    %209 = vmatprep.mubr.f32.mxu0 0.0
    %210 = vmatmul.mubr.f32.gmra.mrb[0].mxu0 %v74
    %v211 = vpop.f32.mrb[0].mxu0
    %v212 = vadd.f32 0.0, %v211
    %v213 = vpop.f32.mrb[0].mxu0
    %v214 = vadd.f32 0.0, %v213
    %215 = vdwg.mxu0
    %216 = vmatprep.subr.mxu0 0.0
    %217 = vmatpush1.xpose.msra.mxu0 %v107
    %218 = vmatprep.subr.mxu0 0.0
    %219 = vmatpush1.xpose.msra.mxu0 %v108
    %220 = vmatprep.subr.mxu0 0.0
    %221 = vmatpush1.xpose.msra.mxu0 %v109
    %222 = vmatprep.subr.mxu0 0.0
    %223 = vmatpush1.xpose.msra.mxu0 %v110
    %224 = vmatprep.subr.mxu0 0.0
    %225 = vmatpush1.xpose.msra.mxu0 %v111
    %226 = vmatprep.subr.mxu0 0.0
    %227 = vmatpush1.xpose.msra.mxu0 %v112
    %228 = vmatprep.subr.mxu0 0.0
    %229 = vmatpush1.xpose.msra.mxu0 %v113
    %230 = vmatprep.subr.mxu0 0.0
    %231 = vmatpush1.xpose.msra.mxu0 %v114
    %232 = vmatprep.subr.mxu0 0.0
    %233 = vmatpush1.xpose.msra.mxu0 %v115
    %234 = vmatprep.subr.mxu0 0.0
    %235 = vmatpush1.xpose.msra.mxu0 %v116
    %236 = vmatprep.subr.mxu0 0.0
    %237 = vmatpush1.xpose.msra.mxu0 %v117
    %238 = vmatprep.subr.mxu0 0.0
    %239 = vmatpush1.xpose.msra.mxu0 %v118
    %240 = vmatprep.subr.mxu0 0.0
    %241 = vmatpush1.xpose.msra.mxu0 %v119
    %242 = vmatprep.subr.mxu0 0.0
    %243 = vmatpush1.xpose.msra.mxu0 %v120
    %244 = vmatprep.subr.mxu0 0.0
    %245 = vmatpush1.xpose.msra.mxu0 %v121
    %246 = vmatprep.subr.mxu0 0.0
    %247 = vmatpush1.xpose.msra.mxu0 %v122
    %248 = vmatprep.subr.mxu0 0.0
    %249 = vmatpush1.xpose.msra.mxu0 %v123
    %250 = vmatprep.subr.mxu0 0.0
    %251 = vmatpush1.xpose.msra.mxu0 %v124
    %252 = vmatprep.subr.mxu0 0.0
    %253 = vmatpush1.xpose.msra.mxu0 %v125
    %254 = vmatprep.subr.mxu0 0.0
    %255 = vmatpush1.xpose.msra.mxu0 %v126
    %256 = vmatprep.subr.mxu0 0.0
    %257 = vmatpush1.xpose.msra.mxu0 %v127
    %258 = vmatprep.subr.mxu0 0.0
    %259 = vmatpush1.xpose.msra.mxu0 %v128
    %260 = vmatprep.subr.mxu0 0.0
    %261 = vmatpush1.xpose.msra.mxu0 %v129
    %262 = vmatprep.subr.mxu0 0.0
    %263 = vmatpush1.xpose.msra.mxu0 %v130
    %264 = vmatprep.subr.mxu0 0.0
    %265 = vmatpush1.xpose.msra.mxu0 %v131
    %266 = vmatprep.subr.mxu0 0.0
    %267 = vmatpush1.xpose.msra.mxu0 %v132
    %268 = vmatprep.subr.mxu0 0.0
    %269 = vmatpush1.xpose.msra.mxu0 %v133
    %270 = vmatprep.subr.mxu0 0.0
    %271 = vmatpush1.xpose.msra.mxu0 %v134
    %272 = vmatprep.subr.mxu0 0.0
    %273 = vmatpush1.xpose.msra.mxu0 %v135
    %274 = vmatprep.subr.mxu0 0.0
    %275 = vmatpush1.xpose.msra.mxu0 %v136
    %276 = vmatprep.subr.mxu0 0.0
    %277 = vmatpush1.xpose.msra.mxu0 %v137
    %278 = vmatprep.subr.mxu0 0.0
    %279 = vmatpush1.xpose.msra.mxu0 %v138
    %280 = vmatprep.mubr.f32.mxu0 0.0
    %281 = vmatmul.mubr.f32.gmra.mrb[0].mxu0 %v73
    %v282 = vpop.f32.mrb[0].mxu0
    %v283 = vadd.f32 0.0, %v282
    %v284 = vpop.f32.mrb[0].mxu0
    %v285 = vadd.f32 0.0, %v284
    %286 = vmatprep.mubr.f32.mxu0 0.0
    %287 = vmatmul.mubr.f32.gmra.mrb[0].mxu0 %v74
    %v288 = vpop.f32.mrb[0].mxu0
    %v289 = vadd.f32 0.0, %v288
    %v290 = vpop.f32.mrb[0].mxu0
    %v291 = vadd.f32 0.0, %v290
    %292 = vdwg.mxu0
    %v293 = vld [vmem:[#allocation7] sm:$0xff]
    %v294 = vld [vmem:[#allocation7 + $0x8] sm:$0xff]
    %v295 = vld [vmem:[#allocation7 + $0x10] sm:$0xff]
    %v296 = vld [vmem:[#allocation7 + $0x18] sm:$0xff]
    %v297 = vld [vmem:[#allocation7 + $0x20] sm:$0xff]
    %v298 = vld [vmem:[#allocation7 + $0x28] sm:$0xff]
    %v299 = vld [vmem:[#allocation7 + $0x30] sm:$0xff]
    %v300 = vld [vmem:[#allocation7 + $0x38] sm:$0xff]
    %v301 = vld [vmem:[#allocation7 + $0x40] sm:$0xff]
    %v302 = vld [vmem:[#allocation7 + $0x48] sm:$0xff]
    %v303 = vld [vmem:[#allocation7 + $0x50] sm:$0xff]
    %v304 = vld [vmem:[#allocation7 + $0x58] sm:$0xff]
    %v305 = vld [vmem:[#allocation7 + $0x60] sm:$0xff]
    %v306 = vld [vmem:[#allocation7 + $0x68] sm:$0xff]
    %v307 = vld [vmem:[#allocation7 + $0x70] sm:$0xff]
    %v308 = vld [vmem:[#allocation7 + $0x78] sm:$0xff]
    %v309 = vld [vmem:[#allocation7 + $0x80] sm:$0xff]
    %v310 = vld [vmem:[#allocation7 + $0x88] sm:$0xff]
    %v311 = vld [vmem:[#allocation7 + $0x90] sm:$0xff]
    %v312 = vld [vmem:[#allocation7 + $0x98] sm:$0xff]
    %v313 = vld [vmem:[#allocation7 + $0xa0] sm:$0xff]
    %v314 = vld [vmem:[#allocation7 + $0xa8] sm:$0xff]
    %v315 = vld [vmem:[#allocation7 + $0xb0] sm:$0xff]
    %v316 = vld [vmem:[#allocation7 + $0xb8] sm:$0xff]
    %v317 = vld [vmem:[#allocation7 + $0xc0] sm:$0xff]
    %v318 = vld [vmem:[#allocation7 + $0xc8] sm:$0xff]
    %v319 = vld [vmem:[#allocation7 + $0xd0] sm:$0xff]
    %v320 = vld [vmem:[#allocation7 + $0xd8] sm:$0xff]
    %v321 = vld [vmem:[#allocation7 + $0xe0] sm:$0xff]
    %v322 = vld [vmem:[#allocation7 + $0xe8] sm:$0xff]
    %v323 = vld [vmem:[#allocation7 + $0xf0] sm:$0xff]
    %v324 = vld [vmem:[#allocation7 + $0xf8] sm:$0xff]
    %v325 = vld [vmem:[#allocation7 + $0x100] sm:$0xff]
    %v326 = vld [vmem:[#allocation7 + $0x108] sm:$0xff]
    %v327 = vld [vmem:[#allocation7 + $0x110] sm:$0xff]
    %v328 = vld [vmem:[#allocation7 + $0x118] sm:$0xff]
    %v329 = vld [vmem:[#allocation7 + $0x120] sm:$0xff]
    %v330 = vld [vmem:[#allocation7 + $0x128] sm:$0xff]
    %v331 = vld [vmem:[#allocation7 + $0x130] sm:$0xff]
    %v332 = vld [vmem:[#allocation7 + $0x138] sm:$0xff]
    %v333 = vld [vmem:[#allocation7 + $0x140] sm:$0xff]
    %v334 = vld [vmem:[#allocation7 + $0x148] sm:$0xff]
    %v335 = vld [vmem:[#allocation7 + $0x150] sm:$0xff]
    %v336 = vld [vmem:[#allocation7 + $0x158] sm:$0xff]
    %v337 = vld [vmem:[#allocation7 + $0x160] sm:$0xff]
    %v338 = vld [vmem:[#allocation7 + $0x168] sm:$0xff]
    %v339 = vld [vmem:[#allocation7 + $0x170] sm:$0xff]
    %v340 = vld [vmem:[#allocation7 + $0x178] sm:$0xff]
    %v341 = vld [vmem:[#allocation7 + $0x180] sm:$0xff]
    %v342 = vld [vmem:[#allocation7 + $0x188] sm:$0xff]
    %v343 = vld [vmem:[#allocation7 + $0x190] sm:$0xff]
    %v344 = vld [vmem:[#allocation7 + $0x198] sm:$0xff]
    %v345 = vld [vmem:[#allocation7 + $0x1a0] sm:$0xff]
    %v346 = vld [vmem:[#allocation7 + $0x1a8] sm:$0xff]
    %v347 = vld [vmem:[#allocation7 + $0x1b0] sm:$0xff]
    %v348 = vld [vmem:[#allocation7 + $0x1b8] sm:$0xff]
    %v349 = vld [vmem:[#allocation7 + $0x1c0] sm:$0xff]
    %v350 = vld [vmem:[#allocation7 + $0x1c8] sm:$0xff]
    %v351 = vld [vmem:[#allocation7 + $0x1d0] sm:$0xff]
    %v352 = vld [vmem:[#allocation7 + $0x1d8] sm:$0xff]
    %v353 = vld [vmem:[#allocation7 + $0x1e0] sm:$0xff]
    %v354 = vld [vmem:[#allocation7 + $0x1e8] sm:$0xff]
    %v355 = vld [vmem:[#allocation7 + $0x1f0] sm:$0xff]
    %v356 = vld [vmem:[#allocation7 + $0x1f8] sm:$0xff]
    %357 = vmatprep.subr.mxu0 0.0
    %358 = vmatpush1.xpose.msra.mxu0 %v293
    %359 = vmatprep.subr.mxu0 0.0
    %360 = vmatpush1.xpose.msra.mxu0 %v294
    %361 = vmatprep.subr.mxu0 0.0
    %362 = vmatpush1.xpose.msra.mxu0 %v295
    %363 = vmatprep.subr.mxu0 0.0
    %364 = vmatpush1.xpose.msra.mxu0 %v296
    %365 = vmatprep.subr.mxu0 0.0
    %366 = vmatpush1.xpose.msra.mxu0 %v297
    %367 = vmatprep.subr.mxu0 0.0
    %368 = vmatpush1.xpose.msra.mxu0 %v298
    %369 = vmatprep.subr.mxu0 0.0
    %370 = vmatpush1.xpose.msra.mxu0 %v299
    %371 = vmatprep.subr.mxu0 0.0
    %372 = vmatpush1.xpose.msra.mxu0 %v300
    %373 = vmatprep.subr.mxu0 0.0
    %374 = vmatpush1.xpose.msra.mxu0 %v301
    %375 = vmatprep.subr.mxu0 0.0
    %376 = vmatpush1.xpose.msra.mxu0 %v302
    %377 = vmatprep.subr.mxu0 0.0
    %378 = vmatpush1.xpose.msra.mxu0 %v303
    %379 = vmatprep.subr.mxu0 0.0
    %380 = vmatpush1.xpose.msra.mxu0 %v304
    %381 = vmatprep.subr.mxu0 0.0
    %382 = vmatpush1.xpose.msra.mxu0 %v305
    %383 = vmatprep.subr.mxu0 0.0
    %384 = vmatpush1.xpose.msra.mxu0 %v306
    %385 = vmatprep.subr.mxu0 0.0
    %386 = vmatpush1.xpose.msra.mxu0 %v307
    %387 = vmatprep.subr.mxu0 0.0
    %388 = vmatpush1.xpose.msra.mxu0 %v308
    %389 = vmatprep.subr.mxu0 0.0
    %390 = vmatpush1.xpose.msra.mxu0 %v309
    %391 = vmatprep.subr.mxu0 0.0
    %392 = vmatpush1.xpose.msra.mxu0 %v310
    %393 = vmatprep.subr.mxu0 0.0
    %394 = vmatpush1.xpose.msra.mxu0 %v311
    %395 = vmatprep.subr.mxu0 0.0
    %396 = vmatpush1.xpose.msra.mxu0 %v312
    %397 = vmatprep.subr.mxu0 0.0
    %398 = vmatpush1.xpose.msra.mxu0 %v313
    %399 = vmatprep.subr.mxu0 0.0
    %400 = vmatpush1.xpose.msra.mxu0 %v314
    %401 = vmatprep.subr.mxu0 0.0
    %402 = vmatpush1.xpose.msra.mxu0 %v315
    %403 = vmatprep.subr.mxu0 0.0
    %404 = vmatpush1.xpose.msra.mxu0 %v316
    %405 = vmatprep.subr.mxu0 0.0
    %406 = vmatpush1.xpose.msra.mxu0 %v317
    %407 = vmatprep.subr.mxu0 0.0
    %408 = vmatpush1.xpose.msra.mxu0 %v318
    %409 = vmatprep.subr.mxu0 0.0
    %410 = vmatpush1.xpose.msra.mxu0 %v319
    %411 = vmatprep.subr.mxu0 0.0
    %412 = vmatpush1.xpose.msra.mxu0 %v320
    %413 = vmatprep.subr.mxu0 0.0
    %414 = vmatpush1.xpose.msra.mxu0 %v321
    %415 = vmatprep.subr.mxu0 0.0
    %416 = vmatpush1.xpose.msra.mxu0 %v322
    %417 = vmatprep.subr.mxu0 0.0
    %418 = vmatpush1.xpose.msra.mxu0 %v323
    %419 = vmatprep.subr.mxu0 0.0
    %420 = vmatpush1.xpose.msra.mxu0 %v324
    %421 = vmatprep.mubr.f32.mxu0 0.0
    %422 = vmatmul.mubr.f32.gmra.mrb[0].mxu0 %v73
    %v423 = vpop.f32.mrb[0].mxu0
    %v424 = vadd.f32 0.0, %v423
    %v425 = vpop.f32.mrb[0].mxu0
    %v426 = vadd.f32 0.0, %v425
    %427 = vmatprep.mubr.f32.mxu0 0.0
    %428 = vmatmul.mubr.f32.gmra.mrb[0].mxu0 %v74
    %v429 = vpop.f32.mrb[0].mxu0
    %v430 = vadd.f32 0.0, %v429
    %v431 = vpop.f32.mrb[0].mxu0
    %v432 = vadd.f32 0.0, %v431
    %433 = vdwg.mxu0
    %434 = vmatprep.subr.mxu0 0.0
    %435 = vmatpush1.xpose.msra.mxu0 %v325
    %436 = vmatprep.subr.mxu0 0.0
    %437 = vmatpush1.xpose.msra.mxu0 %v326
    %438 = vmatprep.subr.mxu0 0.0
    %439 = vmatpush1.xpose.msra.mxu0 %v327
    %440 = vmatprep.subr.mxu0 0.0
    %441 = vmatpush1.xpose.msra.mxu0 %v328
    %442 = vmatprep.subr.mxu0 0.0
    %443 = vmatpush1.xpose.msra.mxu0 %v329
    %444 = vmatprep.subr.mxu0 0.0
    %445 = vmatpush1.xpose.msra.mxu0 %v330
    %446 = vmatprep.subr.mxu0 0.0
    %447 = vmatpush1.xpose.msra.mxu0 %v331
    %448 = vmatprep.subr.mxu0 0.0
    %449 = vmatpush1.xpose.msra.mxu0 %v332
    %450 = vmatprep.subr.mxu0 0.0
    %451 = vmatpush1.xpose.msra.mxu0 %v333
    %452 = vmatprep.subr.mxu0 0.0
    %453 = vmatpush1.xpose.msra.mxu0 %v334
    %454 = vmatprep.subr.mxu0 0.0
    %455 = vmatpush1.xpose.msra.mxu0 %v335
    %456 = vmatprep.subr.mxu0 0.0
    %457 = vmatpush1.xpose.msra.mxu0 %v336
    %458 = vmatprep.subr.mxu0 0.0
    %459 = vmatpush1.xpose.msra.mxu0 %v337
    %460 = vmatprep.subr.mxu0 0.0
    %461 = vmatpush1.xpose.msra.mxu0 %v338
    %462 = vmatprep.subr.mxu0 0.0
    %463 = vmatpush1.xpose.msra.mxu0 %v339
    %464 = vmatprep.subr.mxu0 0.0
    %465 = vmatpush1.xpose.msra.mxu0 %v340
    %466 = vmatprep.subr.mxu0 0.0
    %467 = vmatpush1.xpose.msra.mxu0 %v341
    %468 = vmatprep.subr.mxu0 0.0
    %469 = vmatpush1.xpose.msra.mxu0 %v342
    %470 = vmatprep.subr.mxu0 0.0
    %471 = vmatpush1.xpose.msra.mxu0 %v343
    %472 = vmatprep.subr.mxu0 0.0
    %473 = vmatpush1.xpose.msra.mxu0 %v344
    %474 = vmatprep.subr.mxu0 0.0
    %475 = vmatpush1.xpose.msra.mxu0 %v345
    %476 = vmatprep.subr.mxu0 0.0
    %477 = vmatpush1.xpose.msra.mxu0 %v346
    %478 = vmatprep.subr.mxu0 0.0
    %479 = vmatpush1.xpose.msra.mxu0 %v347
    %480 = vmatprep.subr.mxu0 0.0
    %481 = vmatpush1.xpose.msra.mxu0 %v348
    %482 = vmatprep.subr.mxu0 0.0
    %483 = vmatpush1.xpose.msra.mxu0 %v349
    %484 = vmatprep.subr.mxu0 0.0
    %485 = vmatpush1.xpose.msra.mxu0 %v350
    %486 = vmatprep.subr.mxu0 0.0
    %487 = vmatpush1.xpose.msra.mxu0 %v351
    %488 = vmatprep.subr.mxu0 0.0
    %489 = vmatpush1.xpose.msra.mxu0 %v352
    %490 = vmatprep.subr.mxu0 0.0
    %491 = vmatpush1.xpose.msra.mxu0 %v353
    %492 = vmatprep.subr.mxu0 0.0
    %493 = vmatpush1.xpose.msra.mxu0 %v354
    %494 = vmatprep.subr.mxu0 0.0
    %495 = vmatpush1.xpose.msra.mxu0 %v355
    %496 = vmatprep.subr.mxu0 0.0
    %497 = vmatpush1.xpose.msra.mxu0 %v356
    %498 = vmatprep.mubr.f32.mxu0 0.0
    %499 = vmatmul.mubr.f32.gmra.mrb[0].mxu0 %v73
    %v500 = vpop.f32.mrb[0].mxu0
    %v501 = vadd.f32 0.0, %v500
    %v502 = vpop.f32.mrb[0].mxu0
    %v503 = vadd.f32 0.0, %v502
    %504 = vmatprep.mubr.f32.mxu0 0.0
    %505 = vmatmul.mubr.f32.gmra.mrb[0].mxu0 %v74
    %v506 = vpop.f32.mrb[0].mxu0
    %v507 = vadd.f32 0.0, %v506
    %v508 = vpop.f32.mrb[0].mxu0
    %v509 = vadd.f32 0.0, %v508
    %510 = vdwg.mxu0
    %v511 = vxor.u32 %v206, 2147483648
    %v512 = vxor.u32 %v208, 2147483648
    %v513 = vxor.u32 %v283, 2147483648
    %v514 = vxor.u32 %v285, 2147483648
    %v515 = vxor.u32 %v212, 2147483648
    %v516 = vxor.u32 %v214, 2147483648
    %v517 = vxor.u32 %v289, 2147483648
    %v518 = vxor.u32 %v291, 2147483648
    %v519 = vmul.f32 %v511, 1.442695
    %v520 = vpow.pop %v519
    %v521 = vmul.f32 %v512, 1.442695
    %v522 = vpow.pop %v521
    %v523 = vmul.f32 %v513, 1.442695
    %v524 = vpow.pop %v523
    %v525 = vmul.f32 %v514, 1.442695
    %v526 = vpow.pop %v525
    %v527 = vmul.f32 %v515, 1.442695
    %v528 = vpow.pop %v527
    %v529 = vmul.f32 %v516, 1.442695
    %v530 = vpow.pop %v529
    %v531 = vmul.f32 %v517, 1.442695
    %v532 = vpow.pop %v531
    %v533 = vmul.f32 %v518, 1.442695
    %v534 = vpow.pop %v533
    %v535 = vadd.f32 %v520, 1.0
    %v536 = vadd.f32 %v522, 1.0
    %v537 = vadd.f32 %v524, 1.0
    %v538 = vadd.f32 %v526, 1.0
    %v539 = vadd.f32 %v528, 1.0
    %v540 = vadd.f32 %v530, 1.0
    %v541 = vadd.f32 %v532, 1.0
    %v542 = vadd.f32 %v534, 1.0
    %v543 = vrcp.pop %v535
    %v544 = vmul.f32 1.0, %v543
    %v545 = vrcp.pop %v536
    %v546 = vmul.f32 1.0, %v545
    %v547 = vrcp.pop %v537
    %v548 = vmul.f32 1.0, %v547
    %v549 = vrcp.pop %v538
    %v550 = vmul.f32 1.0, %v549
    %v551 = vrcp.pop %v539
    %v552 = vmul.f32 1.0, %v551
    %v553 = vrcp.pop %v540
    %v554 = vmul.f32 1.0, %v553
    %v555 = vrcp.pop %v541
    %v556 = vmul.f32 1.0, %v555
    %v557 = vrcp.pop %v542
    %v558 = vmul.f32 1.0, %v557
    %v559 = vmul.f32 %v206, %v544
    %v560 = vmul.f32 %v208, %v546
    %v561 = vmul.f32 %v283, %v548
    %v562 = vmul.f32 %v285, %v550
    %v563 = vmul.f32 %v212, %v552
    %v564 = vmul.f32 %v214, %v554
    %v565 = vmul.f32 %v289, %v556
    %v566 = vmul.f32 %v291, %v558
    %v567 = vmul.f32 %v559, %v424
    %v568 = vmul.f32 %v560, %v426
    %v569 = vmul.f32 %v561, %v501
    %v570 = vmul.f32 %v562, %v503
    %v571 = vmul.f32 %v563, %v430
    %v572 = vmul.f32 %v564, %v432
    %v573 = vmul.f32 %v565, %v507
    %v574 = vmul.f32 %v566, %v509
    %v575 = vld [vmem:[#allocation8] sm:$0xff]
    %v576 = vld [vmem:[#allocation8 + $0x8] sm:$0xff]
    %v577 = vld [vmem:[#allocation8 + $0x10] sm:$0xff]
    %v578 = vld [vmem:[#allocation8 + $0x18] sm:$0xff]
    %v579 = vld [vmem:[#allocation8 + $0x20] sm:$0xff]
    %v580 = vld [vmem:[#allocation8 + $0x28] sm:$0xff]
    %v581 = vld [vmem:[#allocation8 + $0x30] sm:$0xff]
    %v582 = vld [vmem:[#allocation8 + $0x38] sm:$0xff]
    %v583 = vld [vmem:[#allocation8 + $0x40] sm:$0xff]
    %v584 = vld [vmem:[#allocation8 + $0x48] sm:$0xff]
    %v585 = vld [vmem:[#allocation8 + $0x50] sm:$0xff]
    %v586 = vld [vmem:[#allocation8 + $0x58] sm:$0xff]
    %v587 = vld [vmem:[#allocation8 + $0x60] sm:$0xff]
    %v588 = vld [vmem:[#allocation8 + $0x68] sm:$0xff]
    %v589 = vld [vmem:[#allocation8 + $0x70] sm:$0xff]
    %v590 = vld [vmem:[#allocation8 + $0x78] sm:$0xff]
    %v591 = vld [vmem:[#allocation8 + $0x80] sm:$0xff]
    %v592 = vld [vmem:[#allocation8 + $0x88] sm:$0xff]
    %v593 = vld [vmem:[#allocation8 + $0x90] sm:$0xff]
    %v594 = vld [vmem:[#allocation8 + $0x98] sm:$0xff]
    %v595 = vld [vmem:[#allocation8 + $0xa0] sm:$0xff]
    %v596 = vld [vmem:[#allocation8 + $0xa8] sm:$0xff]
    %v597 = vld [vmem:[#allocation8 + $0xb0] sm:$0xff]
    %v598 = vld [vmem:[#allocation8 + $0xb8] sm:$0xff]
    %v599 = vld [vmem:[#allocation8 + $0xc0] sm:$0xff]
    %v600 = vld [vmem:[#allocation8 + $0xc8] sm:$0xff]
    %v601 = vld [vmem:[#allocation8 + $0xd0] sm:$0xff]
    %v602 = vld [vmem:[#allocation8 + $0xd8] sm:$0xff]
    %v603 = vld [vmem:[#allocation8 + $0xe0] sm:$0xff]
    %v604 = vld [vmem:[#allocation8 + $0xe8] sm:$0xff]
    %v605 = vld [vmem:[#allocation8 + $0xf0] sm:$0xff]
    %v606 = vld [vmem:[#allocation8 + $0xf8] sm:$0xff]
    %v607 = vld [vmem:[#allocation8 + $0x100] sm:$0xff]
    %v608 = vld [vmem:[#allocation8 + $0x108] sm:$0xff]
    %v609 = vld [vmem:[#allocation8 + $0x110] sm:$0xff]
    %v610 = vld [vmem:[#allocation8 + $0x118] sm:$0xff]
    %v611 = vld [vmem:[#allocation8 + $0x120] sm:$0xff]
    %v612 = vld [vmem:[#allocation8 + $0x128] sm:$0xff]
    %v613 = vld [vmem:[#allocation8 + $0x130] sm:$0xff]
    %v614 = vld [vmem:[#allocation8 + $0x138] sm:$0xff]
    %v615 = vld [vmem:[#allocation8 + $0x140] sm:$0xff]
    %v616 = vld [vmem:[#allocation8 + $0x148] sm:$0xff]
    %v617 = vld [vmem:[#allocation8 + $0x150] sm:$0xff]
    %v618 = vld [vmem:[#allocation8 + $0x158] sm:$0xff]
    %v619 = vld [vmem:[#allocation8 + $0x160] sm:$0xff]
    %v620 = vld [vmem:[#allocation8 + $0x168] sm:$0xff]
    %v621 = vld [vmem:[#allocation8 + $0x170] sm:$0xff]
    %v622 = vld [vmem:[#allocation8 + $0x178] sm:$0xff]
    %v623 = vld [vmem:[#allocation8 + $0x180] sm:$0xff]
    %v624 = vld [vmem:[#allocation8 + $0x188] sm:$0xff]
    %v625 = vld [vmem:[#allocation8 + $0x190] sm:$0xff]
    %v626 = vld [vmem:[#allocation8 + $0x198] sm:$0xff]
    %v627 = vld [vmem:[#allocation8 + $0x1a0] sm:$0xff]
    %v628 = vld [vmem:[#allocation8 + $0x1a8] sm:$0xff]
    %v629 = vld [vmem:[#allocation8 + $0x1b0] sm:$0xff]
    %v630 = vld [vmem:[#allocation8 + $0x1b8] sm:$0xff]
    %v631 = vld [vmem:[#allocation8 + $0x1c0] sm:$0xff]
    %v632 = vld [vmem:[#allocation8 + $0x1c8] sm:$0xff]
    %v633 = vld [vmem:[#allocation8 + $0x1d0] sm:$0xff]
    %v634 = vld [vmem:[#allocation8 + $0x1d8] sm:$0xff]
    %v635 = vld [vmem:[#allocation8 + $0x1e0] sm:$0xff]
    %v636 = vld [vmem:[#allocation8 + $0x1e8] sm:$0xff]
    %v637 = vld [vmem:[#allocation8 + $0x1f0] sm:$0xff]
    %v638 = vld [vmem:[#allocation8 + $0x1f8] sm:$0xff]
    %639 = vmatprep.subr.mxu0 %v576
    %640 = vmatpush1.xpose.msra.mxu0 %v575
    %641 = vmatprep.subr.mxu0 %v580
    %642 = vmatpush1.xpose.msra.mxu0 %v579
    %643 = vmatprep.subr.mxu0 %v584
    %644 = vmatpush1.xpose.msra.mxu0 %v583
    %645 = vmatprep.subr.mxu0 %v588
    %646 = vmatpush1.xpose.msra.mxu0 %v587
    %647 = vmatprep.subr.mxu0 %v592
    %648 = vmatpush1.xpose.msra.mxu0 %v591
    %649 = vmatprep.subr.mxu0 %v596
    %650 = vmatpush1.xpose.msra.mxu0 %v595
    %651 = vmatprep.subr.mxu0 %v600
    %652 = vmatpush1.xpose.msra.mxu0 %v599
    %653 = vmatprep.subr.mxu0 %v604
    %654 = vmatpush1.xpose.msra.mxu0 %v603
    %655 = vmatprep.subr.mxu0 %v608
    %656 = vmatpush1.xpose.msra.mxu0 %v607
    %657 = vmatprep.subr.mxu0 %v612
    %658 = vmatpush1.xpose.msra.mxu0 %v611
    %659 = vmatprep.subr.mxu0 %v616
    %660 = vmatpush1.xpose.msra.mxu0 %v615
    %661 = vmatprep.subr.mxu0 %v620
    %662 = vmatpush1.xpose.msra.mxu0 %v619
    %663 = vmatprep.subr.mxu0 %v624
    %664 = vmatpush1.xpose.msra.mxu0 %v623
    %665 = vmatprep.subr.mxu0 %v628
    %666 = vmatpush1.xpose.msra.mxu0 %v627
    %667 = vmatprep.subr.mxu0 %v632
    %668 = vmatpush1.xpose.msra.mxu0 %v631
    %669 = vmatprep.subr.mxu0 %v636
    %670 = vmatpush1.xpose.msra.mxu0 %v635
    %671 = vmatprep.subr.mxu0 0.0
    %672 = vmatpush1.xpose.msra.mxu0 0.0
    %673 = vmatprep.subr.mxu0 0.0
    %674 = vmatpush1.xpose.msra.mxu0 0.0
    %675 = vmatprep.subr.mxu0 0.0
    %676 = vmatpush1.xpose.msra.mxu0 0.0
    %677 = vmatprep.subr.mxu0 0.0
    %678 = vmatpush1.xpose.msra.mxu0 0.0
    %679 = vmatprep.subr.mxu0 0.0
    %680 = vmatpush1.xpose.msra.mxu0 0.0
    %681 = vmatprep.subr.mxu0 0.0
    %682 = vmatpush1.xpose.msra.mxu0 0.0
    %683 = vmatprep.subr.mxu0 0.0
    %684 = vmatpush1.xpose.msra.mxu0 0.0
    %685 = vmatprep.subr.mxu0 0.0
    %686 = vmatpush1.xpose.msra.mxu0 0.0
    %687 = vmatprep.subr.mxu0 0.0
    %688 = vmatpush1.xpose.msra.mxu0 0.0
    %689 = vmatprep.subr.mxu0 0.0
    %690 = vmatpush1.xpose.msra.mxu0 0.0
    %691 = vmatprep.subr.mxu0 0.0
    %692 = vmatpush1.xpose.msra.mxu0 0.0
    %693 = vmatprep.subr.mxu0 0.0
    %694 = vmatpush1.xpose.msra.mxu0 0.0
    %695 = vmatprep.subr.mxu0 0.0
    %696 = vmatpush1.xpose.msra.mxu0 0.0
    %697 = vmatprep.subr.mxu0 0.0
    %698 = vmatpush1.xpose.msra.mxu0 0.0
    %699 = vmatprep.subr.mxu0 0.0
    %700 = vmatpush1.xpose.msra.mxu0 0.0
    %701 = vmatprep.subr.mxu0 0.0
    %702 = vmatpush1.xpose.msra.mxu0 0.0
    %703 = vmatprep.mubr.f32.mxu0 %v568
    %704 = vmatmul.mubr.f32.gmra.mrb[0].mxu0 %v567
    %v705 = vpop.f32.mrb[0].mxu0
    %v706 = vadd.f32 0.0, %v705
    %v707 = vpop.f32.mrb[0].mxu0
    %708 = vmatprep.mubr.f32.mxu0 %v572
    %709 = vmatmul.mubr.f32.gmra.mrb[0].mxu0 %v571
    %v710 = vpop.f32.mrb[0].mxu0
    %v711 = vadd.f32 0.0, %v710
    %v712 = vpop.f32.mrb[0].mxu0
    %713 = vdwg.mxu0
    %714 = vmatprep.subr.mxu0 %v578
    %715 = vmatpush1.xpose.msra.mxu0 %v577
    %716 = vmatprep.subr.mxu0 %v582
    %717 = vmatpush1.xpose.msra.mxu0 %v581
    %718 = vmatprep.subr.mxu0 %v586
    %719 = vmatpush1.xpose.msra.mxu0 %v585
    %720 = vmatprep.subr.mxu0 %v590
    %721 = vmatpush1.xpose.msra.mxu0 %v589
    %722 = vmatprep.subr.mxu0 %v594
    %723 = vmatpush1.xpose.msra.mxu0 %v593
    %724 = vmatprep.subr.mxu0 %v598
    %725 = vmatpush1.xpose.msra.mxu0 %v597
    %726 = vmatprep.subr.mxu0 %v602
    %727 = vmatpush1.xpose.msra.mxu0 %v601
    %728 = vmatprep.subr.mxu0 %v606
    %729 = vmatpush1.xpose.msra.mxu0 %v605
    %730 = vmatprep.subr.mxu0 %v610
    %731 = vmatpush1.xpose.msra.mxu0 %v609
    %732 = vmatprep.subr.mxu0 %v614
    %733 = vmatpush1.xpose.msra.mxu0 %v613
    %734 = vmatprep.subr.mxu0 %v618
    %735 = vmatpush1.xpose.msra.mxu0 %v617
    %736 = vmatprep.subr.mxu0 %v622
    %737 = vmatpush1.xpose.msra.mxu0 %v621
    %738 = vmatprep.subr.mxu0 %v626
    %739 = vmatpush1.xpose.msra.mxu0 %v625
    %740 = vmatprep.subr.mxu0 %v630
    %741 = vmatpush1.xpose.msra.mxu0 %v629
    %742 = vmatprep.subr.mxu0 %v634
    %743 = vmatpush1.xpose.msra.mxu0 %v633
    %744 = vmatprep.subr.mxu0 %v638
    %745 = vmatpush1.xpose.msra.mxu0 %v637
    %746 = vmatprep.subr.mxu0 0.0
    %747 = vmatpush1.xpose.msra.mxu0 0.0
    %748 = vmatprep.subr.mxu0 0.0
    %749 = vmatpush1.xpose.msra.mxu0 0.0
    %750 = vmatprep.subr.mxu0 0.0
    %751 = vmatpush1.xpose.msra.mxu0 0.0
    %752 = vmatprep.subr.mxu0 0.0
    %753 = vmatpush1.xpose.msra.mxu0 0.0
    %754 = vmatprep.subr.mxu0 0.0
    %755 = vmatpush1.xpose.msra.mxu0 0.0
    %756 = vmatprep.subr.mxu0 0.0
    %757 = vmatpush1.xpose.msra.mxu0 0.0
    %758 = vmatprep.subr.mxu0 0.0
    %759 = vmatpush1.xpose.msra.mxu0 0.0
    %760 = vmatprep.subr.mxu0 0.0
    %761 = vmatpush1.xpose.msra.mxu0 0.0
    %762 = vmatprep.subr.mxu0 0.0
    %763 = vmatpush1.xpose.msra.mxu0 0.0
    %764 = vmatprep.subr.mxu0 0.0
    %765 = vmatpush1.xpose.msra.mxu0 0.0
    %766 = vmatprep.subr.mxu0 0.0
    %767 = vmatpush1.xpose.msra.mxu0 0.0
    %768 = vmatprep.subr.mxu0 0.0
    %769 = vmatpush1.xpose.msra.mxu0 0.0
    %770 = vmatprep.subr.mxu0 0.0
    %771 = vmatpush1.xpose.msra.mxu0 0.0
    %772 = vmatprep.subr.mxu0 0.0
    %773 = vmatpush1.xpose.msra.mxu0 0.0
    %774 = vmatprep.subr.mxu0 0.0
    %775 = vmatpush1.xpose.msra.mxu0 0.0
    %776 = vmatprep.subr.mxu0 0.0
    %777 = vmatpush1.xpose.msra.mxu0 0.0
    %778 = vmatprep.mubr.f32.mxu0 %v570
    %779 = vmatmul.mubr.f32.gmra.mrb[0].mxu0 %v569
    %v780 = vpop.f32.mrb[0].mxu0
    %v781 = vadd.f32 %v706, %v780
    %v782 = vpop.f32.mrb[0].mxu0
    %783 = vmatprep.mubr.f32.mxu0 %v574
    %784 = vmatmul.mubr.f32.gmra.mrb[0].mxu0 %v573
    %v785 = vpop.f32.mrb[0].mxu0
    %v786 = vadd.f32 %v711, %v785
    %v787 = vpop.f32.mrb[0].mxu0
    %788 = vdwg.mxu0
    %789 = vst [vmem:[#allocation10] sm:$0xff] %v781
    %790 = vst [vmem:[#allocation10 + $0x8] sm:$0xff] %v786
    // Predicated region
    $region34: #{tpu_custom_call.1} parent=1 // pred_check
      _
    $region35: #{tpu_custom_call.1} parent=1 // pred_check_branch
      %792 = sbr.rel (0) target = $region37
    $region36: #{tpu_custom_call.1} parent=1 // pred_region
      %s794 = ssub.s32 256, 256
      %795 = vsyncadd [#allocation4], %s794
      %s796 = sshll.u32 [#allocation10], 4
      %s797 = int_to_ptr.vmem [resolvable:$true] %s796
      %802 = dma.vmem_to_hbm [thread:$0]  %s797, 256, %s4, [#allocation4], 128, 128, 8
    $region37: #{tpu_custom_call.1} parent=1 // pred_fallthru
      _
    // Predicated region
    $region38: #{tpu_custom_call.1} parent=1 // pred_check
      _
    $region39: #{tpu_custom_call.1} parent=1 // pred_check_branch
      %804 = sbr.rel (0) target = $region41
    $region40: #{tpu_custom_call.1} parent=1 // pred_region
      %805 = dma.done [#allocation4], 256
    $region41: #{tpu_custom_call.1} parent=1 // pred_fallthru
      _
    %806 = vsyncpa [#allocation3], 1
    %807 = vsyncpa [#allocation6], 1
    %808 = vsyncpa [#allocation9], 1
    %809 = vsyncpa [#allocation4], 1

</llo_original>
